<compile_context>
chip_gen: v7x
topology: tpu7x:2x2x1
jax: 0.10.0
libtpu: 0.0.40
codegen_flags: <defaults>
</compile_context>

<pallas_src>
import functools

import jax
import jax.numpy as jnp
from jax.experimental import pallas as pl
from jax.experimental.pallas import tpu as pltpu


def _clip_loss_kernel(img_ref, txt_ref, out_ref,
                      txt_n_ref, col_m_ref, col_s_ref, i2t_ref, diag_ref,
                      *, inv_temp, eps):
    i = pl.program_id(0)
    n_blk = pl.num_programs(0)
    tb = img_ref.shape[0]
    b_total = txt_ref.shape[0]
    mm_dtype = txt_n_ref.dtype

    # ---- one-time init: normalize full text matrix, zero accumulators ----
    @pl.when(i == 0)
    def _init():
        txt = txt_ref[...].astype(jnp.float32)                        # (B, D)
        ss = jnp.sum(txt * txt, axis=-1, keepdims=True)
        txt_n = txt * jax.lax.rsqrt(jnp.maximum(ss, eps * eps))       # unit rows
        txt_n_ref[...] = txt_n.astype(mm_dtype)
        col_m_ref[...] = jnp.full(col_m_ref.shape, -jnp.inf, jnp.float32)
        col_s_ref[...] = jnp.zeros(col_s_ref.shape, jnp.float32)
        i2t_ref[...] = jnp.zeros(i2t_ref.shape, jnp.float32)
        diag_ref[...] = jnp.zeros(diag_ref.shape, jnp.float32)

    # ---- normalize this block of image rows; fold 1/T into the scale ----
    img = img_ref[...].astype(jnp.float32)                            # (TB, D)
    ss = jnp.sum(img * img, axis=-1, keepdims=True)
    img_n = img * (jax.lax.rsqrt(jnp.maximum(ss, eps * eps)) * inv_temp)

    # ---- (TB, B) logits tile on the MXU (contraction on dim 1 of both) ----
    txt_n = txt_n_ref[...]
    logits = jax.lax.dot_general(
        img_n.astype(mm_dtype), txt_n,
        dimension_numbers=(((1,), (1,)), ((), ())),
        preferred_element_type=jnp.float32)                           # (TB, B)

    # ---- diagonal logits for this row block: direct row-wise dot ----
    start = pl.multiple_of(i * tb, tb)
    txt_diag = txt_n_ref[pl.ds(start, tb), :].astype(jnp.float32)     # (TB, D)
    diag = jnp.sum(img_n * txt_diag, axis=-1, keepdims=True)          # (TB, 1)

    # ---- i2t: exact row logsumexp (tile spans the full row width) ----
    row_m = jnp.max(logits, axis=-1, keepdims=True)
    row_lse = jnp.log(jnp.sum(jnp.exp(logits - row_m),
                              axis=-1, keepdims=True)) + row_m        # (TB, 1)
    i2t_ref[...] += jnp.sum(row_lse - diag, keepdims=True)
    diag_ref[...] += jnp.sum(diag, keepdims=True)

    # ---- t2i: online column logsumexp via axis=0 reductions (no transpose) ----
    blk_m = jnp.max(logits, axis=0, keepdims=True)                    # (1, B)
    new_m = jnp.maximum(col_m_ref[...], blk_m)
    col_s_ref[...] = (col_s_ref[...] * jnp.exp(col_m_ref[...] - new_m)
                      + jnp.sum(jnp.exp(logits - new_m), axis=0, keepdims=True))
    col_m_ref[...] = new_m

    # ---- finalize: symmetric cross-entropy, single scalar ----
    @pl.when(i == n_blk - 1)
    def _finalize():
        col_lse = jnp.log(col_s_ref[...]) + col_m_ref[...]            # (1, B)
        t2i = jnp.sum(col_lse, keepdims=True)                         # (1, 1)
        loss = (i2t_ref[...] + t2i - diag_ref[...]) * (0.5 / b_total)
        out_ref[...] = loss


def _pick_block_rows(batch, max_rows):
    """Largest multiple of 8 that divides `batch` and is <= max_rows."""
    if batch <= max_rows:
        return batch
    best = None
    for cand in range(8, max_rows + 1, 8):
        if batch % cand == 0:
            best = cand
    return best if best is not None else batch


def clip_loss(image_features, text_features, temperature=0.07,
              *, block_rows=256, matmul_dtype=jnp.float32):
    """Pallas TPU implementation of CLIPLoss.forward.

    image_features, text_features: (B, D) arrays.  Returns the scalar loss.
    matmul_dtype: jnp.bfloat16 recommended on v6e/v7x (f32 accumulation kept).
    """
    B, D = image_features.shape
    assert text_features.shape == (B, D)
    # TODO(synk): for production shapes that are not (8,128)-friendly, pad B to
    # a multiple of 8 / D to a multiple of 128 on the host and mask padded rows
    # to -inf; here such shapes just fall back to a single full-size block.
    tb = _pick_block_rows(B, block_rows)
    grid = (B // tb,)

    kernel = functools.partial(_clip_loss_kernel,
                               inv_temp=float(1.0 / temperature),
                               eps=1e-12)

    itemsize_mm = jnp.dtype(matmul_dtype).itemsize
    # Rough VMEM budget: text input (double-buffered) + normalized-text scratch
    # + image blocks (double-buffered) + logits tile and its exp temporaries.
    vmem_bytes = (2 * B * D * 4 + B * D * itemsize_mm
                  + 2 * tb * D * 4 + 4 * tb * B * 4 + (1 << 20))
    params = dict(dimension_semantics=("arbitrary",))  # sequential column accum
    if vmem_bytes > 24 * 1024 * 1024:
        # Large batches: raise the scoped-VMEM budget (leaving DMA headroom).
        # NOTE: v7x has only 64 MiB physical VMEM -- prefer bf16 operands and
        # smaller block_rows there rather than pushing this limit.
        params["vmem_limit_bytes"] = int(min(vmem_bytes, 100 * 1024 * 1024))
    compiler_params = pltpu.CompilerParams(**params)

    cost = pl.CostEstimate(
        flops=2 * B * B * D + 8 * B * D,
        transcendentals=2 * B * B + 2 * B,
        bytes_accessed=2 * B * D * image_features.dtype.itemsize + 4,
    )

    out = pl.pallas_call(
        kernel,
        out_shape=jax.ShapeDtypeStruct((1, 1), jnp.float32),
        grid=grid,
        in_specs=[
            pl.BlockSpec((tb, D), lambda i: (i, 0)),   # image rows, streamed
            pl.BlockSpec((B, D), lambda i: (0, 0)),    # full text, fetched once
        ],
        out_specs=pl.BlockSpec((1, 1), lambda i: (0, 0)),
        scratch_shapes=[
            pltpu.VMEM((B, D), matmul_dtype),   # normalized text features
            pltpu.VMEM((1, B), jnp.float32),    # running column max
            pltpu.VMEM((1, B), jnp.float32),    # running column sum(exp)
            pltpu.VMEM((1, 1), jnp.float32),    # sum of (row_lse - diag)
            pltpu.VMEM((1, 1), jnp.float32),    # sum of diagonal logits
        ],
        compiler_params=compiler_params,
        cost_estimate=cost,
    )(image_features, text_features)
    return out[0, 0]


def _reference(image_features, text_features, temperature):
    """Pure-JAX reference of the PyTorch CLIPLoss math."""
    inv_t = 1.0 / temperature
    img_n = image_features / jnp.maximum(
        jnp.linalg.norm(image_features, axis=-1, keepdims=True), 1e-12)
    txt_n = text_features / jnp.maximum(
        jnp.linalg.norm(text_features, axis=-1, keepdims=True), 1e-12)
    img_s = img_n * inv_t                      # fold 1/T (mathematically identical)
    logits = img_s @ txt_n.T                   # (B, B), already scaled by 1/T
    diag = jnp.sum(img_s * txt_n, axis=-1)     # == jnp.diag(logits)
    lse_i2t = jax.nn.logsumexp(logits, axis=-1)
    lse_t2i = jax.nn.logsumexp(logits, axis=0)
    return 0.5 * ((lse_i2t - diag).mean() + (lse_t2i - diag).mean())


if __name__ == "__main__":
    key = jax.random.PRNGKey(0)
    k1, k2, k3, k4 = jax.random.split(key, 4)

    # 1) Small single-block case (B=8, D=32), f32 MXU.
    B, D = 8, 32
    img = jax.random.normal(k1, (B, D), dtype=jnp.float32)
    txt = jax.random.normal(k2, (B, D), dtype=jnp.float32)
    loss = clip_loss(img, txt, temperature=0.07)
    jax.block_until_ready(loss)
    ref = _reference(img, txt, 0.07)
    assert jnp.allclose(loss, ref, atol=2e-4, rtol=2e-4), (loss, ref)

    # 2) Tiled multi-block path (B=256, D=128 -> 4 row blocks of 64), f32 MXU.
    B2, D2 = 256, 128
    img2 = jax.random.normal(k3, (B2, D2), dtype=jnp.float32)
    txt2 = jax.random.normal(k4, (B2, D2), dtype=jnp.float32)
    loss2 = clip_loss(img2, txt2, temperature=0.07, block_rows=64)
    jax.block_until_ready(loss2)
    ref2 = _reference(img2, txt2, 0.07)
    assert jnp.allclose(loss2, ref2, atol=2e-4, rtol=2e-4), (loss2, ref2)

    # 3) bf16 MXU operands (v6e/v7x fast path), f32 accumulation.
    loss3 = clip_loss(img2, txt2, temperature=0.07, block_rows=64,
                      matmul_dtype=jnp.bfloat16)
    jax.block_until_ready(loss3)
    assert jnp.allclose(loss3, ref2, atol=5e-2, rtol=5e-2), (loss3, ref2)

    print("KERNEL_OK")
</pallas_src>

<mosaic_0001>
module attributes {stable_mosaic.version = 11 : i64} {
  func.func @_clip_loss_kernel(%arg0: i32, %arg1: memref<8x32xf32, #tpu.memory_space<vmem>>, %arg2: memref<8x32xf32, #tpu.memory_space<vmem>>, %arg3: memref<1x1xf32, #tpu.memory_space<vmem>>, %arg4: memref<8x32xf32, #tpu.memory_space<vmem>>, %arg5: memref<1x8xf32, #tpu.memory_space<vmem>>, %arg6: memref<1x8xf32, #tpu.memory_space<vmem>>, %arg7: memref<1x1xf32, #tpu.memory_space<vmem>>, %arg8: memref<1x1xf32, #tpu.memory_space<vmem>>) attributes {dimension_semantics = [#tpu.dimension_semantics<arbitrary>], iteration_bounds = array<i64: 1>, scalar_prefetch = 0 : i64, scratch_operands = 5 : i64, tpu.core_type = #tpu.core_type<tc>, window_params = [{transform_indices = @transform_0, window_bounds = array<i64: 8, 32>}, {pipeline_mode = #tpu.pipeline_mode<synchronous>, transform_indices = @transform_1, window_bounds = array<i64: 8, 32>}, {pipeline_mode = #tpu.pipeline_mode<synchronous>, transform_indices = @transform_2, window_bounds = array<i64: 1, 1>}]} {
    %c0_i32 = arith.constant 0 : i32
    %0 = arith.cmpi eq, %arg0, %c0_i32 : i32
    %1 = arith.extui %0 : i1 to i32
    %c0_i32_0 = arith.constant 0 : i32
    %2 = arith.cmpi ne, %1, %c0_i32_0 : i32
    scf.if %2 {
      %c0_35 = arith.constant 0 : index
      %c0_36 = arith.constant 0 : index
      %69 = vector.load %arg2[%c0_35, %c0_36] : memref<8x32xf32, #tpu.memory_space<vmem>>, vector<8x32xf32>
      %70 = arith.mulf %69, %69 : vector<8x32xf32>
      %cst_37 = arith.constant dense<0.000000e+00> : vector<8xf32>
      %71 = vector.multi_reduction <add>, %70, %cst_37 [1] : vector<8x32xf32> to vector<8xf32>
      %72 = vector.shape_cast %71 : vector<8xf32> to vector<8x1xf32>
      %cst_38 = arith.constant 1.000000e-24 : f32
      %73 = vector.broadcast %cst_38 : f32 to vector<8x1xf32>
      %74 = arith.maximumf %72, %73 : vector<8x1xf32>
      %75 = math.rsqrt %74 : vector<8x1xf32>
      %76 = vector.broadcast %75 : vector<8x1xf32> to vector<8x32xf32>
      %77 = arith.mulf %69, %76 : vector<8x32xf32>
      %c0_39 = arith.constant 0 : index
      %c0_40 = arith.constant 0 : index
      %78 = vector.load %arg4[%c0_39, %c0_40] : memref<8x32xf32, #tpu.memory_space<vmem>>, vector<8x32xf32>
      tpu.vector_store %arg4[%c0_39, %c0_40], %77 {strides = array<i32>} : memref<8x32xf32, #tpu.memory_space<vmem>>, vector<8x32xf32>,
      %cst_41 = arith.constant 0xFF800000 : f32
      %79 = vector.broadcast %cst_41 : f32 to vector<1x8xf32>
      %c0_42 = arith.constant 0 : index
      %c0_43 = arith.constant 0 : index
      %80 = vector.load %arg5[%c0_42, %c0_43] : memref<1x8xf32, #tpu.memory_space<vmem>>, vector<1x8xf32>
      tpu.vector_store %arg5[%c0_42, %c0_43], %79 {strides = array<i32>} : memref<1x8xf32, #tpu.memory_space<vmem>>, vector<1x8xf32>,
      %cst_44 = arith.constant 0.000000e+00 : f32
      %81 = vector.broadcast %cst_44 : f32 to vector<1x8xf32>
      %c0_45 = arith.constant 0 : index
      %c0_46 = arith.constant 0 : index
      %82 = vector.load %arg6[%c0_45, %c0_46] : memref<1x8xf32, #tpu.memory_space<vmem>>, vector<1x8xf32>
      tpu.vector_store %arg6[%c0_45, %c0_46], %81 {strides = array<i32>} : memref<1x8xf32, #tpu.memory_space<vmem>>, vector<1x8xf32>,
      %cst_47 = arith.constant 0.000000e+00 : f32
      %83 = vector.broadcast %cst_47 : f32 to vector<1x1xf32>
      %c0_48 = arith.constant 0 : index
      %c0_49 = arith.constant 0 : index
      %84 = vector.load %arg7[%c0_48, %c0_49] : memref<1x1xf32, #tpu.memory_space<vmem>>, vector<1x1xf32>
      tpu.vector_store %arg7[%c0_48, %c0_49], %83 {strides = array<i32>} : memref<1x1xf32, #tpu.memory_space<vmem>>, vector<1x1xf32>,
      %cst_50 = arith.constant 0.000000e+00 : f32
      %85 = vector.broadcast %cst_50 : f32 to vector<1x1xf32>
      %c0_51 = arith.constant 0 : index
      %c0_52 = arith.constant 0 : index
      %86 = vector.load %arg8[%c0_51, %c0_52] : memref<1x1xf32, #tpu.memory_space<vmem>>, vector<1x1xf32>
      tpu.vector_store %arg8[%c0_51, %c0_52], %85 {strides = array<i32>} : memref<1x1xf32, #tpu.memory_space<vmem>>, vector<1x1xf32>,
    } else {
    }
    %c0 = arith.constant 0 : index
    %c0_1 = arith.constant 0 : index
    %3 = vector.load %arg1[%c0, %c0_1] : memref<8x32xf32, #tpu.memory_space<vmem>>, vector<8x32xf32>
    %4 = arith.mulf %3, %3 : vector<8x32xf32>
    %cst = arith.constant dense<0.000000e+00> : vector<8xf32>
    %5 = vector.multi_reduction <add>, %4, %cst [1] : vector<8x32xf32> to vector<8xf32>
    %6 = vector.shape_cast %5 : vector<8xf32> to vector<8x1xf32>
    %cst_2 = arith.constant 1.000000e-24 : f32
    %7 = vector.broadcast %cst_2 : f32 to vector<8x1xf32>
    %8 = arith.maximumf %6, %7 : vector<8x1xf32>
    %9 = math.rsqrt %8 : vector<8x1xf32>
    %cst_3 = arith.constant 14.2857141 : f32
    %10 = vector.broadcast %cst_3 : f32 to vector<8x1xf32>
    %11 = arith.mulf %9, %10 : vector<8x1xf32>
    %12 = vector.broadcast %11 : vector<8x1xf32> to vector<8x32xf32>
    %13 = arith.mulf %3, %12 : vector<8x32xf32>
    %c0_4 = arith.constant 0 : index
    %c0_5 = arith.constant 0 : index
    %14 = vector.load %arg4[%c0_4, %c0_5] : memref<8x32xf32, #tpu.memory_space<vmem>>, vector<8x32xf32>
    %cst_6 = arith.constant dense<0.000000e+00> : vector<8x8xf32>
    %15 = tpu.matmul %13, %14, %cst_6 {dimension_numbers = #tpu.dot_dimension_numbers<[1], [1], [0], [0], [0, 0, 1, 0], [], []>} : vector<8x32xf32>, vector<8x32xf32>, vector<8x8xf32> -> vector<8x8xf32>
    %c8_i32 = arith.constant 8 : i32
    %16 = arith.muli %arg0, %c8_i32 : i32
    %17 = tpu.assume_multiple %16, 8 : i32
    %18 = arith.index_cast %17 : i32 to index
    %c0_7 = arith.constant 0 : index
    %19 = vector.load %arg4[%18, %c0_7] : memref<8x32xf32, #tpu.memory_space<vmem>>, vector<8x32xf32>
    %20 = arith.mulf %13, %19 : vector<8x32xf32>
    %cst_8 = arith.constant dense<0.000000e+00> : vector<8xf32>
    %21 = vector.multi_reduction <add>, %20, %cst_8 [1] : vector<8x32xf32> to vector<8xf32>
    %22 = vector.shape_cast %21 : vector<8xf32> to vector<8x1xf32>
    %cst_9 = arith.constant dense<0xFF800000> : vector<8xf32>
    %23 = vector.multi_reduction <maximumf>, %15, %cst_9 [1] : vector<8x8xf32> to vector<8xf32>
    %24 = vector.shape_cast %23 : vector<8xf32> to vector<8x1xf32>
    %25 = vector.broadcast %24 : vector<8x1xf32> to vector<8x8xf32>
    %26 = arith.subf %15, %25 : vector<8x8xf32>
    %27 = math.exp %26 : vector<8x8xf32>
    %cst_10 = arith.constant dense<0.000000e+00> : vector<8xf32>
    %28 = vector.multi_reduction <add>, %27, %cst_10 [1] : vector<8x8xf32> to vector<8xf32>
    %29 = vector.shape_cast %28 : vector<8xf32> to vector<8x1xf32>
    %30 = math.log %29 : vector<8x1xf32>
    %31 = arith.addf %30, %24 : vector<8x1xf32>
    %c0_11 = arith.constant 0 : index
    %c0_12 = arith.constant 0 : index
    %32 = vector.load %arg7[%c0_11, %c0_12] : memref<1x1xf32, #tpu.memory_space<vmem>>, vector<1x1xf32>
    %33 = arith.subf %31, %22 : vector<8x1xf32>
    %34 = vector.shape_cast %33 : vector<8x1xf32> to vector<1x8x1xf32>
    %cst_13 = arith.constant dense<0.000000e+00> : vector<1xf32>
    %35 = vector.multi_reduction <add>, %34, %cst_13 [1, 2] : vector<1x8x1xf32> to vector<1xf32>
    %36 = vector.shape_cast %35 : vector<1xf32> to vector<1x1x1xf32>
    %37 = vector.extract %36[0, 0, 0] : f32 from vector<1x1x1xf32>
    %38 = vector.broadcast %37 : f32 to vector<1x1xf32>
    %39 = arith.addf %32, %38 : vector<1x1xf32>
    %c0_14 = arith.constant 0 : index
    %c0_15 = arith.constant 0 : index
    %40 = vector.load %arg7[%c0_14, %c0_15] : memref<1x1xf32, #tpu.memory_space<vmem>>, vector<1x1xf32>
    tpu.vector_store %arg7[%c0_14, %c0_15], %39 {strides = array<i32>} : memref<1x1xf32, #tpu.memory_space<vmem>>, vector<1x1xf32>,
    %c0_16 = arith.constant 0 : index
    %c0_17 = arith.constant 0 : index
    %41 = vector.load %arg8[%c0_16, %c0_17] : memref<1x1xf32, #tpu.memory_space<vmem>>, vector<1x1xf32>
    %42 = vector.shape_cast %22 : vector<8x1xf32> to vector<1x8x1xf32>
    %cst_18 = arith.constant dense<0.000000e+00> : vector<1xf32>
    %43 = vector.multi_reduction <add>, %42, %cst_18 [1, 2] : vector<1x8x1xf32> to vector<1xf32>
    %44 = vector.shape_cast %43 : vector<1xf32> to vector<1x1x1xf32>
    %45 = vector.extract %44[0, 0, 0] : f32 from vector<1x1x1xf32>
    %46 = vector.broadcast %45 : f32 to vector<1x1xf32>
    %47 = arith.addf %41, %46 : vector<1x1xf32>
    %c0_19 = arith.constant 0 : index
    %c0_20 = arith.constant 0 : index
    %48 = vector.load %arg8[%c0_19, %c0_20] : memref<1x1xf32, #tpu.memory_space<vmem>>, vector<1x1xf32>
    tpu.vector_store %arg8[%c0_19, %c0_20], %47 {strides = array<i32>} : memref<1x1xf32, #tpu.memory_space<vmem>>, vector<1x1xf32>,
    %cst_21 = arith.constant dense<0xFF800000> : vector<8xf32>
    %49 = vector.multi_reduction <maximumf>, %15, %cst_21 [0] : vector<8x8xf32> to vector<8xf32>
    %50 = vector.shape_cast %49 : vector<8xf32> to vector<1x8xf32>
    %c0_22 = arith.constant 0 : index
    %c0_23 = arith.constant 0 : index
    %51 = vector.load %arg5[%c0_22, %c0_23] : memref<1x8xf32, #tpu.memory_space<vmem>>, vector<1x8xf32>
    %52 = arith.maximumf %51, %50 : vector<1x8xf32>
    %c0_24 = arith.constant 0 : index
    %c0_25 = arith.constant 0 : index
    %53 = vector.load %arg6[%c0_24, %c0_25] : memref<1x8xf32, #tpu.memory_space<vmem>>, vector<1x8xf32>
    %c0_26 = arith.constant 0 : index
    %c0_27 = arith.constant 0 : index
    %54 = vector.load %arg5[%c0_26, %c0_27] : memref<1x8xf32, #tpu.memory_space<vmem>>, vector<1x8xf32>
    %55 = arith.subf %54, %52 : vector<1x8xf32>
    %56 = math.exp %55 : vector<1x8xf32>
    %57 = arith.mulf %53, %56 : vector<1x8xf32>
    %58 = vector.broadcast %52 : vector<1x8xf32> to vector<8x8xf32>
    %59 = arith.subf %15, %58 : vector<8x8xf32>
    %60 = math.exp %59 : vector<8x8xf32>
    %cst_28 = arith.constant dense<0.000000e+00> : vector<8xf32>
    %61 = vector.multi_reduction <add>, %60, %cst_28 [0] : vector<8x8xf32> to vector<8xf32>
    %62 = vector.shape_cast %61 : vector<8xf32> to vector<1x8xf32>
    %63 = arith.addf %57, %62 : vector<1x8xf32>
    %c0_29 = arith.constant 0 : index
    %c0_30 = arith.constant 0 : index
    %64 = vector.load %arg6[%c0_29, %c0_30] : memref<1x8xf32, #tpu.memory_space<vmem>>, vector<1x8xf32>
    tpu.vector_store %arg6[%c0_29, %c0_30], %63 {strides = array<i32>} : memref<1x8xf32, #tpu.memory_space<vmem>>, vector<1x8xf32>,
    %c0_31 = arith.constant 0 : index
    %c0_32 = arith.constant 0 : index
    %65 = vector.load %arg5[%c0_31, %c0_32] : memref<1x8xf32, #tpu.memory_space<vmem>>, vector<1x8xf32>
    tpu.vector_store %arg5[%c0_31, %c0_32], %52 {strides = array<i32>} : memref<1x8xf32, #tpu.memory_space<vmem>>, vector<1x8xf32>,
    %c0_i32_33 = arith.constant 0 : i32
    %66 = arith.cmpi eq, %arg0, %c0_i32_33 : i32
    %67 = arith.extui %66 : i1 to i32
    %c0_i32_34 = arith.constant 0 : i32
    %68 = arith.cmpi ne, %67, %c0_i32_34 : i32
    scf.if %68 {
      %c0_35 = arith.constant 0 : index
      %c0_36 = arith.constant 0 : index
      %69 = vector.load %arg6[%c0_35, %c0_36] : memref<1x8xf32, #tpu.memory_space<vmem>>, vector<1x8xf32>
      %70 = math.log %69 : vector<1x8xf32>
      %c0_37 = arith.constant 0 : index
      %c0_38 = arith.constant 0 : index
      %71 = vector.load %arg5[%c0_37, %c0_38] : memref<1x8xf32, #tpu.memory_space<vmem>>, vector<1x8xf32>
      %72 = arith.addf %70, %71 : vector<1x8xf32>
      %73 = vector.shape_cast %72 : vector<1x8xf32> to vector<1x1x8xf32>
      %cst_39 = arith.constant dense<0.000000e+00> : vector<1xf32>
      %74 = vector.multi_reduction <add>, %73, %cst_39 [1, 2] : vector<1x1x8xf32> to vector<1xf32>
      %75 = vector.shape_cast %74 : vector<1xf32> to vector<1x1x1xf32>
      %76 = vector.extract %75[0, 0, 0] : f32 from vector<1x1x1xf32>
      %77 = vector.broadcast %76 : f32 to vector<1x1xf32>
      %c0_40 = arith.constant 0 : index
      %c0_41 = arith.constant 0 : index
      %78 = vector.load %arg7[%c0_40, %c0_41] : memref<1x1xf32, #tpu.memory_space<vmem>>, vector<1x1xf32>
      %79 = arith.addf %78, %77 : vector<1x1xf32>
      %c0_42 = arith.constant 0 : index
      %c0_43 = arith.constant 0 : index
      %80 = vector.load %arg8[%c0_42, %c0_43] : memref<1x1xf32, #tpu.memory_space<vmem>>, vector<1x1xf32>
      %81 = arith.subf %79, %80 : vector<1x1xf32>
      %cst_44 = arith.constant 6.250000e-02 : f32
      %82 = vector.broadcast %cst_44 : f32 to vector<1x1xf32>
      %83 = arith.mulf %81, %82 : vector<1x1xf32>
      %c0_45 = arith.constant 0 : index
      %c0_46 = arith.constant 0 : index
      %84 = vector.load %arg3[%c0_45, %c0_46] : memref<1x1xf32, #tpu.memory_space<vmem>>, vector<1x1xf32>
      tpu.vector_store %arg3[%c0_45, %c0_46], %83 {strides = array<i32>} : memref<1x1xf32, #tpu.memory_space<vmem>>, vector<1x1xf32>,
    } else {
    }
    return
  }
  func.func @transform_0(%arg0: i32) -> (i32, i32) {
    %c0_i32 = arith.constant 0 : i32
    %c0_i32_0 = arith.constant 0 : i32
    return %arg0, %c0_i32 : i32, i32
  }
  func.func @transform_1(%arg0: i32) -> (i32, i32) {
    %c0_i32 = arith.constant 0 : i32
    %c0_i32_0 = arith.constant 0 : i32
    %c0_i32_1 = arith.constant 0 : i32
    return %c0_i32, %c0_i32_0 : i32, i32
  }
  func.func @transform_2(%arg0: i32) -> (i32, i32) {
    %c0_i32 = arith.constant 0 : i32
    %c0_i32_0 = arith.constant 0 : i32
    %c0_i32_1 = arith.constant 0 : i32
    return %c0_i32, %c0_i32_0 : i32, i32
  }
}

</mosaic_0001>

<llo_original>
// kernel: tpu_custom_call.1
$region0: #{tpu_custom_call.1}
  #allocation0 [shape = 'u32[]', space=smem, size = 0x4, offset = 0x4, fixed_abs, tag = 'smem constant byte address 0x4 - core index']
  #allocation1 [shape = 'u32[144,128]{1,0:T(1,128)}', space=vmem, size = 0x12000, scoped, tag = 'internal scratch']
  #allocation2 [shape = 'f32[8,32]{1,0:T(8,128)}', space=vmem, size = 0x1000, scoped, tag = 'scratch operand']
  #allocation3 [shape = 'f32[1,8]{1,0:T(1,128)}', space=vmem, size = 0x200, scoped, tag = 'scratch operand']
  #allocation4 [shape = 'f32[1,8]{1,0:T(1,128)}', space=vmem, size = 0x200, scoped, tag = 'scratch operand']
  #allocation5 [shape = 'f32[1,1]{1,0:T(1,128)}', space=vmem, size = 0x200, scoped, tag = 'scratch operand']
  #allocation6 [shape = 'f32[1,1]{1,0:T(1,128)}', space=vmem, size = 0x200, scoped, tag = 'scratch operand']
  %s0 = inlined_call_operand.hbm [shape: f32[8,32], index: 0, kind: input, shape index: {}]
  %s1 = inlined_call_operand.hbm [shape: f32[8,32], index: 1, kind: input, shape index: {}]
  %s2 = inlined_call_operand.hbm [shape: f32[1,1], index: 2, kind: output, shape index: {}]
  %s3 = sld [smem:[#allocation0]]
  $region34: #{tpu_custom_call.1} parent=0
    _
  %s5 = ssub.s32 1, %s3
  %s6 = scalar_select 0, %s5, %s3
  $region1: #{tpu_custom_call.1} parent=0
    #allocation7 [shape = 'u8[4096]{0}', space=vmem, size = 0x1000, scoped, tag = 'input window, operand 0, single buffered']
    #allocation8 [shape = 's32[1]{0}', space=sflag, size = 0x4, scoped, tag = 'scoped memory for tpu_custom_call.1']
    #allocation9 [shape = 's32[1]{0}', space=sflag, size = 0x4, scoped, tag = 'scoped memory for tpu_custom_call.1']
    #allocation10 [shape = 'u8[4096]{0}', space=vmem, size = 0x1000, scoped, tag = 'input window, operand 1, single buffered']
    #allocation11 [shape = 's32[1]{0}', space=sflag, size = 0x4, scoped, tag = 'scoped memory for tpu_custom_call.1']
    #allocation12 [shape = 'u8[512]{0}', space=vmem, size = 0x400, scoped, tag = 'output window, operand 0, single buffered']
    %7 = vsyncpa [#allocation8], 0
    %8 = vsyncpa [#allocation11], 0
    %9 = vsyncpa [#allocation9], 0
    // Predicated region
    $region2: #{tpu_custom_call.1} parent=1 // pred_check
      _
    $region3: #{tpu_custom_call.1} parent=1 // pred_check_branch
      %11 = sbr.rel (0) target = $region5
    $region4: #{tpu_custom_call.1} parent=1 // pred_region
      %s13 = ssub.s32 128, 128
      %14 = vsyncadd [#allocation8], %s13
      %s16 = sshll.u32 [#allocation7], 4
      %s17 = int_to_ptr.vmem [resolvable:$true] %s16
      %19 = dma.hbm_to_vmem [thread:$0]  %s0, 128, %s17, [#allocation8]
    $region5: #{tpu_custom_call.1} parent=1 // pred_fallthru
      _
    // Predicated region
    $region6: #{tpu_custom_call.1} parent=1 // pred_check
      _
    $region7: #{tpu_custom_call.1} parent=1 // pred_check_branch
      %21 = sbr.rel (0) target = $region9
    $region8: #{tpu_custom_call.1} parent=1 // pred_region
      %s23 = ssub.s32 128, 128
      %24 = vsyncadd [#allocation11], %s23
      %s26 = sshll.u32 [#allocation10], 4
      %s27 = int_to_ptr.vmem [resolvable:$true] %s26
      %29 = dma.hbm_to_vmem [thread:$0]  %s1, 128, %s27, [#allocation11]
    $region9: #{tpu_custom_call.1} parent=1 // pred_fallthru
      _
    // Predicated region
    $region10: #{tpu_custom_call.1} parent=1 // pred_check
      _
    $region11: #{tpu_custom_call.1} parent=1 // pred_check_branch
      %31 = sbr.rel (0) target = $region13
    $region12: #{tpu_custom_call.1} parent=1 // pred_region
      %32 = dma.done [#allocation8], 128
    $region13: #{tpu_custom_call.1} parent=1 // pred_fallthru
      _
    // Predicated region
    $region14: #{tpu_custom_call.1} parent=1 // pred_check
      _
    $region15: #{tpu_custom_call.1} parent=1 // pred_check_branch
      %34 = sbr.rel (0) target = $region17
    $region16: #{tpu_custom_call.1} parent=1 // pred_region
      %35 = dma.done [#allocation11], 128
    $region17: #{tpu_custom_call.1} parent=1 // pred_fallthru
      _
    %p36 = scmp.eq.s32.totalorder 0, 0
    // Predicated region
    $region18: #{tpu_custom_call.1} parent=1 // pred_check
      %p37 = pneg %p36
    $region19: #{tpu_custom_call.1} parent=1 // pred_check_branch
      %39 = sbr.rel (%p37) target = $region21
    $region20: #{tpu_custom_call.1} parent=1 // pred_region
      %v40 = vld [vmem:[#allocation10] sm:$0xff]
      %v41 = vmul.f32 %v40, %v40
      %vm42 = vcmask 261120
      %v43 = vsel %vm42, %v41, 0.0
      %44 = vadd.xlane.f32.xlu0 %v43
      %v45 = vpop.xlane.xlu0 %44
      %v46 = vmax.f32 %v45, 1e-24
      %v47 = vrsqrt.pop %v46
      %v48 = vmul.f32 %v40, %v47
      %49 = vst.msk [vmem:[#allocation2] sm:$0xff] %vm42, %v48
      %vm50 = vcmask 57344
      %51 = vst.msk [vmem:[#allocation3] sm:$0x1] %vm50, -inf
      %52 = vst.msk [vmem:[#allocation4] sm:$0x1] %vm50, 0.0
      %vm53 = vcmask 0
      %54 = vst.msk [vmem:[#allocation5] sm:$0x1] %vm53, 0.0
      %55 = vst.msk [vmem:[#allocation6] sm:$0x1] %vm53, 0.0
    $region21: #{tpu_custom_call.1} parent=1 // pred_fallthru
      _
    %v56 = vld [vmem:[#allocation7] sm:$0xff]
    %v57 = vmul.f32 %v56, %v56
    %vm58 = vcmask 261120
    %v59 = vsel %vm58, %v57, 0.0
    %60 = vadd.xlane.f32.xlu0 %v59
    %v61 = vpop.xlane.xlu0 %60
    %v62 = vmax.f32 %v61, 1e-24
    %v63 = vrsqrt.pop %v62
    %v64 = vmul.f32 %v63, 14.285714
    %v65 = vmul.f32 %v56, %v64
    %v66 = vld [vmem:[#allocation2] sm:$0xff]
    %v68 = vsel %vm58, %v65, 0
    %v71 = vsel %vm58, %v66, 0
    %73 = vmatprep.subr.mxu0 0.0
    %74 = vmatpush1.xpose.msra.mxu0 %v71
    %75 = vmatprep.subr.mxu0 0.0
    %76 = vmatpush1.xpose.msra.mxu0 0.0
    %77 = vmatprep.subr.mxu0 0.0
    %78 = vmatpush1.xpose.msra.mxu0 0.0
    %79 = vmatprep.subr.mxu0 0.0
    %80 = vmatpush1.xpose.msra.mxu0 0.0
    %81 = vmatprep.subr.mxu0 0.0
    %82 = vmatpush1.xpose.msra.mxu0 0.0
    %83 = vmatprep.subr.mxu0 0.0
    %84 = vmatpush1.xpose.msra.mxu0 0.0
    %85 = vmatprep.subr.mxu0 0.0
    %86 = vmatpush1.xpose.msra.mxu0 0.0
    %87 = vmatprep.subr.mxu0 0.0
    %88 = vmatpush1.xpose.msra.mxu0 0.0
    %89 = vmatprep.subr.mxu0 0.0
    %90 = vmatpush1.xpose.msra.mxu0 0.0
    %91 = vmatprep.subr.mxu0 0.0
    %92 = vmatpush1.xpose.msra.mxu0 0.0
    %93 = vmatprep.subr.mxu0 0.0
    %94 = vmatpush1.xpose.msra.mxu0 0.0
    %95 = vmatprep.subr.mxu0 0.0
    %96 = vmatpush1.xpose.msra.mxu0 0.0
    %97 = vmatprep.subr.mxu0 0.0
    %98 = vmatpush1.xpose.msra.mxu0 0.0
    %99 = vmatprep.subr.mxu0 0.0
    %100 = vmatpush1.xpose.msra.mxu0 0.0
    %101 = vmatprep.subr.mxu0 0.0
    %102 = vmatpush1.xpose.msra.mxu0 0.0
    %103 = vmatprep.subr.mxu0 0.0
    %104 = vmatpush1.xpose.msra.mxu0 0.0
    %105 = vmatprep.subr.mxu0 0.0
    %106 = vmatpush1.xpose.msra.mxu0 0.0
    %107 = vmatprep.subr.mxu0 0.0
    %108 = vmatpush1.xpose.msra.mxu0 0.0
    %109 = vmatprep.subr.mxu0 0.0
    %110 = vmatpush1.xpose.msra.mxu0 0.0
    %111 = vmatprep.subr.mxu0 0.0
    %112 = vmatpush1.xpose.msra.mxu0 0.0
    %113 = vmatprep.subr.mxu0 0.0
    %114 = vmatpush1.xpose.msra.mxu0 0.0
    %115 = vmatprep.subr.mxu0 0.0
    %116 = vmatpush1.xpose.msra.mxu0 0.0
    %117 = vmatprep.subr.mxu0 0.0
    %118 = vmatpush1.xpose.msra.mxu0 0.0
    %119 = vmatprep.subr.mxu0 0.0
    %120 = vmatpush1.xpose.msra.mxu0 0.0
    %121 = vmatprep.subr.mxu0 0.0
    %122 = vmatpush1.xpose.msra.mxu0 0.0
    %123 = vmatprep.subr.mxu0 0.0
    %124 = vmatpush1.xpose.msra.mxu0 0.0
    %125 = vmatprep.subr.mxu0 0.0
    %126 = vmatpush1.xpose.msra.mxu0 0.0
    %127 = vmatprep.subr.mxu0 0.0
    %128 = vmatpush1.xpose.msra.mxu0 0.0
    %129 = vmatprep.subr.mxu0 0.0
    %130 = vmatpush1.xpose.msra.mxu0 0.0
    %131 = vmatprep.subr.mxu0 0.0
    %132 = vmatpush1.xpose.msra.mxu0 0.0
    %133 = vmatprep.subr.mxu0 0.0
    %134 = vmatpush1.xpose.msra.mxu0 0.0
    %135 = vmatprep.subr.mxu0 0.0
    %136 = vmatpush1.xpose.msra.mxu0 0.0
    %137 = vmatprep.mubr.f32.mxu0 0.0
    %138 = vmatmul.mubr.f32.gmra.mrb[0].mxu0 %v68
    %v139 = vpop.f32.mrb[0].mxu0
    %v140 = vadd.f32 0.0, %v139
    %v141 = vpop.f32.mrb[0].mxu0
    %142 = vdwg.mxu0
    %s143 = smul.u32 0, 8
    %s144 = scalar_lea.vmem [#allocation2], %s143
    %v145 = vld [vmem:[%s144] sm:$0xff]
    %v146 = vmul.f32 %v65, %v145
    %v147 = vsel %vm58, %v146, 0.0
    %148 = vadd.xlane.f32.xlu0 %v147
    %v149 = vpop.xlane.xlu0 %148
    %vm150 = vcmask 64512
    %v151 = vsel %vm150, %v140, -inf
    %152 = vmax.xlane.f32.xlu0 %v151
    %v153 = vpop.xlane.xlu0 %152
    %v154 = vsub.f32 %v140, %v153
    %v155 = vmul.f32 %v154, 1.442695
    %v156 = vpow.pop %v155
    %v157 = vsel %vm150, %v156, 0.0
    %158 = vadd.xlane.f32.xlu0 %v157
    %v159 = vpop.xlane.xlu0 %158
    %v160 = vlog2.pop %v159
    %v161 = vmul.f32 %v160, 0.6931472
    %v162 = vadd.f32 %v161, %v153
    %v163 = vld [vmem:[#allocation5] sm:$0x1]
    %v164 = vsub.f32 %v162, %v149
    %vm165 = vcmask 7168
    %v166 = vsel %vm165, %v164, 0.0
    %167 = vadd.xlane.f32.xlu0 %v166
    %v168 = vpop.xlane.xlu0 %167
    %v169 = vrot.slane %v168, 4
    %v170 = vadd.f32 %v168, %v169
    %v171 = vrot.slane %v170, 2
    %v172 = vadd.f32 %v170, %v171
    %v173 = vrot.slane %v172, 1
    %v174 = vadd.f32 %v172, %v173
    %s175 = vtos %v174
    %v176 = vstv %s175
    %v177 = vadd.f32 %v163, %v176
    %vm178 = vcmask 0
    %179 = vst.msk [vmem:[#allocation5] sm:$0x1] %vm178, %v177
    %v180 = vld [vmem:[#allocation6] sm:$0x1]
    %v181 = vsel %vm165, %v149, 0.0
    %182 = vadd.xlane.f32.xlu0 %v181
    %v183 = vpop.xlane.xlu0 %182
    %v184 = vrot.slane %v183, 4
    %v185 = vadd.f32 %v183, %v184
    %v186 = vrot.slane %v185, 2
    %v187 = vadd.f32 %v185, %v186
    %v188 = vrot.slane %v187, 1
    %v189 = vadd.f32 %v187, %v188
    %s190 = vtos %v189
    %v191 = vstv %s190
    %v192 = vadd.f32 %v180, %v191
    %193 = vst.msk [vmem:[#allocation6] sm:$0x1] %vm178, %v192
    %v194 = vrot.slane %v151, 4
    %v195 = vmax.f32 %v151, %v194
    %v196 = vrot.slane %v195, 2
    %v197 = vmax.f32 %v195, %v196
    %v198 = vrot.slane %v197, 1
    %v199 = vmax.f32 %v197, %v198
    %v200 = vld [vmem:[#allocation3] sm:$0x1]
    %v201 = vmax.f32 %v200, %v199
    %v202 = vld [vmem:[#allocation4] sm:$0x1]
    %v203 = vsub.f32 %v200, %v201
    %v204 = vmul.f32 %v203, 1.442695
    %v205 = vpow.pop %v204
    %v206 = vmul.f32 %v202, %v205
    %v208 = vlaneseq
    %v209 = vshrl.u32 %v208, 7
    %v210 = vsub.s32 0, %v209
    %v211 = vrot.slane %v201, %v210
    %v213 = vsub.f32 %v140, %v211
    %v214 = vmul.f32 %v213, 1.442695
    %v215 = vpow.pop %v214
    %v216 = vsel %vm150, %v215, 0.0
    %v217 = vrot.slane %v216, 4
    %v218 = vadd.f32 %v216, %v217
    %v219 = vrot.slane %v218, 2
    %v220 = vadd.f32 %v218, %v219
    %v221 = vrot.slane %v220, 1
    %v222 = vadd.f32 %v220, %v221
    %v223 = vadd.f32 %v206, %v222
    %vm224 = vcmask 57344
    %225 = vst.msk [vmem:[#allocation4] sm:$0x1] %vm224, %v223
    %226 = vst.msk [vmem:[#allocation3] sm:$0x1] %vm224, %v201
    // Predicated region
    $region22: #{tpu_custom_call.1} parent=1 // pred_check
      %p227 = pneg %p36
    $region23: #{tpu_custom_call.1} parent=1 // pred_check_branch
      %229 = sbr.rel (%p227) target = $region25
    $region24: #{tpu_custom_call.1} parent=1 // pred_region
      %v230 = vld [vmem:[#allocation4] sm:$0x1]
      %v231 = vlog2.pop %v230
      %v232 = vmul.f32 %v231, 0.6931472
      %v233 = vld [vmem:[#allocation3] sm:$0x1]
      %v234 = vadd.f32 %v232, %v233
      %v235 = vsel %vm224, %v234, 0.0
      %236 = vadd.xlane.f32.xlu0 %v235
      %v237 = vpop.xlane.xlu0 %236
      %v238 = vrot.slane %v237, 4
      %v239 = vadd.f32 %v237, %v238
      %v240 = vrot.slane %v239, 2
      %v241 = vadd.f32 %v239, %v240
      %v242 = vrot.slane %v241, 1
      %v243 = vadd.f32 %v241, %v242
      %s244 = vtos %v243
      %v245 = vstv %s244
      %v246 = vld [vmem:[#allocation5] sm:$0x1]
      %v247 = vadd.f32 %v246, %v245
      %v248 = vld [vmem:[#allocation6] sm:$0x1]
      %v249 = vsub.f32 %v247, %v248
      %v250 = vmul.f32 %v249, 0.0625
      %251 = vst.msk [vmem:[#allocation12] sm:$0x1] %vm178, %v250
    $region25: #{tpu_custom_call.1} parent=1 // pred_fallthru
      _
    // Predicated region
    $region26: #{tpu_custom_call.1} parent=1 // pred_check
      _
    $region27: #{tpu_custom_call.1} parent=1 // pred_check_branch
      %253 = sbr.rel (0) target = $region29
    $region28: #{tpu_custom_call.1} parent=1 // pred_region
      %s255 = ssub.s32 16, 16
      %256 = vsyncadd [#allocation9], %s255
      %s258 = sshll.u32 [#allocation12], 4
      %s259 = int_to_ptr.vmem [resolvable:$true] %s258
      %261 = dma.vmem_to_hbm [thread:$0]  %s259, 16, %s2, [#allocation9]
    $region29: #{tpu_custom_call.1} parent=1 // pred_fallthru
      _
    // Predicated region
    $region30: #{tpu_custom_call.1} parent=1 // pred_check
      _
    $region31: #{tpu_custom_call.1} parent=1 // pred_check_branch
      %263 = sbr.rel (0) target = $region33
    $region32: #{tpu_custom_call.1} parent=1 // pred_region
      %264 = dma.done [#allocation9], 16
    $region33: #{tpu_custom_call.1} parent=1 // pred_fallthru
      _
    %265 = vsyncpa [#allocation8], 1
    %266 = vsyncpa [#allocation11], 1
    %267 = vsyncpa [#allocation9], 1

</llo_original>
